<compile_context>
chip_gen: v7x
topology: tpu7x:2x2x1
jax: 0.10.0
libtpu: 0.0.40
codegen_flags: <defaults>
</compile_context>

<pallas_src>
import functools

import jax
import jax.numpy as jnp
from jax.experimental import pallas as pl
from jax.experimental.pallas import tpu as pltpu


# ----------------------------------------------------------------------------- utils
def _tile(dim: int, target: int, unit: int) -> int:
    """Largest multiple-of-`unit` divisor of `dim` that is <= target (else full dim)."""
    if dim <= target:
        return dim
    t = (target // unit) * unit
    while t >= unit:
        if dim % t == 0:
            return t
        t -= unit
    return dim


def make_pe_row(embed_dim: int, dtype=jnp.float32) -> jnp.ndarray:
    """One row of the (buggy-but-faithful) sinusoidal table: every row is identical."""
    idx = jnp.arange(0, embed_dim, 2, dtype=jnp.float32)
    freqs = 1.0 / (10000.0 ** (2.0 ** (idx / float(embed_dim))))
    row = jnp.ones((embed_dim,), jnp.float32)
    row = row.at[0::2].set(jnp.sin(freqs))
    row = row.at[1::2].set(jnp.cos(freqs))
    return row.astype(dtype)


# ------------------------------------------------------------------- matmul kernel
def _matmul_kernel(*refs, fuse_row: bool, fuse_residual: bool, activation):
    a_ref, b_ref = refs[0], refs[1]
    pos = 2
    row_ref = None
    res_ref = None
    if fuse_row:
        row_ref = refs[pos]
        pos += 1
    if fuse_residual:
        res_ref = refs[pos]
        pos += 1
    o_ref, acc_ref = refs[pos], refs[pos + 1]

    @pl.when(pl.program_id(2) == 0)
    def _init():
        acc_ref[...] = jnp.zeros_like(acc_ref)

    acc_ref[...] += jnp.dot(a_ref[...], b_ref[...],
                            preferred_element_type=jnp.float32)

    @pl.when(pl.program_id(2) == pl.num_programs(2) - 1)
    def _finalize():
        out = acc_ref[...]
        if fuse_row:
            out = out + row_ref[...].astype(jnp.float32)
        if fuse_residual:
            out = out + res_ref[...].astype(jnp.float32)
        if activation == "relu":
            out = jnp.maximum(out, 0.0)
        o_ref[...] = out.astype(o_ref.dtype)


def matmul(a, b, *, row=None, residual=None, activation=None,
           tm_target=256, tn_target=512, tk_target=512):
    """(M,K) @ (K,N) with optional fused (1,N) row add, (M,N) residual add, relu."""
    M, K = a.shape
    Kb, N = b.shape
    assert K == Kb
    tm = _tile(M, tm_target, 8)
    tn = _tile(N, tn_target, 128)
    tk = _tile(K, tk_target, 128)
    grid = (M // tm, N // tn, K // tk)

    in_specs = [pl.BlockSpec((tm, tk), lambda i, j, k: (i, k)),
                pl.BlockSpec((tk, tn), lambda i, j, k: (k, j))]
    operands = [a, b]
    if row is not None:
        in_specs.append(pl.BlockSpec((1, tn), lambda i, j, k: (0, j)))
        operands.append(jnp.asarray(row, dtype=a.dtype).reshape(1, N))
    if residual is not None:
        in_specs.append(pl.BlockSpec((tm, tn), lambda i, j, k: (i, j)))
        operands.append(residual)

    kernel = functools.partial(_matmul_kernel,
                               fuse_row=row is not None,
                               fuse_residual=residual is not None,
                               activation=activation)
    return pl.pallas_call(
        kernel,
        out_shape=jax.ShapeDtypeStruct((M, N), a.dtype),
        grid_spec=pltpu.PrefetchScalarGridSpec(
            num_scalar_prefetch=0,
            grid=grid,
            in_specs=in_specs,
            out_specs=pl.BlockSpec((tm, tn), lambda i, j, k: (i, j)),
            scratch_shapes=[pltpu.VMEM((tm, tn), jnp.float32)],
        ),
        compiler_params=pltpu.CompilerParams(
            dimension_semantics=("parallel", "parallel", "arbitrary")),
    )(*operands)


# ---------------------------------------------------------------- layernorm kernel
def _layernorm_kernel(x_ref, g_ref, b_ref, o_ref, *, eps):
    x = x_ref[...].astype(jnp.float32)
    mean = jnp.mean(x, axis=-1, keepdims=True)
    xc = x - mean
    var = jnp.mean(xc * xc, axis=-1, keepdims=True)
    inv = jax.lax.rsqrt(var + eps)
    y = xc * inv * g_ref[...].astype(jnp.float32) + b_ref[...].astype(jnp.float32)
    o_ref[...] = y.astype(o_ref.dtype)


def layernorm(x, gamma, beta, *, eps=1e-5, tm_target=256):
    M, D = x.shape
    tm = _tile(M, tm_target, 8)
    kernel = functools.partial(_layernorm_kernel, eps=eps)
    return pl.pallas_call(
        kernel,
        out_shape=jax.ShapeDtypeStruct((M, D), x.dtype),
        grid_spec=pltpu.PrefetchScalarGridSpec(
            num_scalar_prefetch=0,
            grid=(M // tm,),
            in_specs=[pl.BlockSpec((tm, D), lambda i: (i, 0)),
                      pl.BlockSpec((1, D), lambda i: (0, 0)),
                      pl.BlockSpec((1, D), lambda i: (0, 0))],
            out_specs=pl.BlockSpec((tm, D), lambda i: (i, 0)),
        ),
        compiler_params=pltpu.CompilerParams(dimension_semantics=("parallel",)),
    )(x, jnp.asarray(gamma, x.dtype).reshape(1, D),
      jnp.asarray(beta, x.dtype).reshape(1, D))


# ---------------------------------------------------------------- attention kernel
def _attention_kernel(q_ref, k_ref, v_ref, o_ref, *, scale):
    q = q_ref[0].astype(jnp.float32)          # (S, Dh)
    k = k_ref[0].astype(jnp.float32)
    v = v_ref[0].astype(jnp.float32)
    s = jax.lax.dot_general(q, k, (((1,), (1,)), ((), ())),
                            preferred_element_type=jnp.float32) * scale
    m = jnp.max(s, axis=-1, keepdims=True)
    p = jnp.exp(s - m)
    l = jnp.sum(p, axis=-1, keepdims=True)
    o = jnp.dot(p, v, preferred_element_type=jnp.float32) / l
    o_ref[0] = o.astype(o_ref.dtype)


def attention(q, k, v):
    """q,k,v: (B*H, S, Dh) -> softmax(q k^T / sqrt(Dh)) v, one grid step per head."""
    BH, S, Dh = q.shape
    kernel = functools.partial(_attention_kernel, scale=Dh ** -0.5)
    spec = pl.BlockSpec((1, S, Dh), lambda h: (h, 0, 0))
    return pl.pallas_call(
        kernel,
        out_shape=jax.ShapeDtypeStruct((BH, S, Dh), q.dtype),
        grid_spec=pltpu.PrefetchScalarGridSpec(
            num_scalar_prefetch=0,
            grid=(BH,),
            in_specs=[spec, spec, spec],
            out_specs=spec,
        ),
        compiler_params=pltpu.CompilerParams(dimension_semantics=("parallel",)),
    )(q, k, v)


# -------------------------------------------------------------------- full forward
def transformer_forward(x, params, cfg):
    B, C, H, W = x.shape
    P, E, nH = cfg["patch_size"], cfg["embed_dim"], cfg["num_heads"]
    Co = cfg["out_channels"]
    Hp, Wp = H // P, W // P
    S = Hp * Wp
    Dh = E // nH

    # PatchEmbedding: Conv2d(k=P, s=P, bias=False) == patchify + matmul.
    patches = x.reshape(B, C, Hp, P, Wp, P).transpose(0, 2, 4, 1, 3, 5)
    patches = patches.reshape(B * S, C * P * P)
    # Fused: patch projection + sinusoidal positional-embedding row add.
    h = matmul(patches, params["w_patch"], row=params["pe_row"])

    # TransformerEncoder: norm_first, relu FFN, no biases, dropout=0 (identity).
    for p in params["layers"]:
        hn = layernorm(h, p["ln1_g"], p["ln1_b"])
        qkv = matmul(hn, p["w_qkv"])                              # (B*S, 3E)
        qkv = qkv.reshape(B, S, 3, nH, Dh).transpose(2, 0, 3, 1, 4)
        q = qkv[0].reshape(B * nH, S, Dh)
        k = qkv[1].reshape(B * nH, S, Dh)
        v = qkv[2].reshape(B * nH, S, Dh)
        attn = attention(q, k, v)
        attn = attn.reshape(B, nH, S, Dh).transpose(0, 2, 1, 3).reshape(B * S, E)
        h = matmul(attn, p["w_out"], residual=h)                  # fused residual
        hn = layernorm(h, p["ln2_g"], p["ln2_b"])
        f = matmul(hn, p["w_ff1"], activation="relu")             # fused relu
        h = matmul(f, p["w_ff2"], residual=h)                     # fused residual
    h = layernorm(h, params["final_g"], params["final_b"])

    # PatchUnEmbedding: ConvTranspose2d(k=P, s=P, bias=False) == matmul + fold.
    # (The module's unused `proj` Linear is not part of forward and is skipped.)
    y = matmul(h, params["w_unpatch"])                            # (B*S, Co*P*P)
    y = y.reshape(B, Hp, Wp, Co, P, P).transpose(0, 3, 1, 4, 2, 5)
    return y.reshape(B, Co, H, W)


# ------------------------------------------------------------------- params / ref
def init_params(key, cfg):
    C, Co, P = cfg["in_channels"], cfg["out_channels"], cfg["patch_size"]
    E, L = cfg["embed_dim"], cfg["num_layers"]
    FF = E * 4  # dim_feedforward = embed_dim << 2
    keys = iter(jax.random.split(key, 2 + 4 * L))

    def w(shape, scale=0.05):
        return scale * jax.random.normal(next(keys), shape, dtype=jnp.float32)

    layers = []
    for _ in range(L):
        layers.append(dict(
            ln1_g=jnp.ones((E,), jnp.float32), ln1_b=jnp.zeros((E,), jnp.float32),
            w_qkv=w((E, 3 * E)),
            w_out=w((E, E)),
            ln2_g=jnp.ones((E,), jnp.float32), ln2_b=jnp.zeros((E,), jnp.float32),
            w_ff1=w((E, FF)),
            w_ff2=w((FF, E)),
        ))
    return dict(
        w_patch=w((C * P * P, E)),
        pe_row=make_pe_row(E),
        w_unpatch=w((E, Co * P * P)),
        final_g=jnp.ones((E,), jnp.float32), final_b=jnp.zeros((E,), jnp.float32),
        layers=layers,
    )


def _ref_layernorm(x, g, b, eps=1e-5):
    mu = jnp.mean(x, axis=-1, keepdims=True)
    xc = x - mu
    var = jnp.mean(xc * xc, axis=-1, keepdims=True)
    return xc * jax.lax.rsqrt(var + eps) * g + b


def reference_forward(x, params, cfg):
    """Pure-JAX reference mirroring the PyTorch module's forward semantics."""
    B, C, H, W = x.shape
    P, E, nH = cfg["patch_size"], cfg["embed_dim"], cfg["num_heads"]
    Co = cfg["out_channels"]
    Hp, Wp = H // P, W // P
    S = Hp * Wp
    Dh = E // nH
    patches = x.reshape(B, C, Hp, P, Wp, P).transpose(0, 2, 4, 1, 3, 5)
    patches = patches.reshape(B, S, C * P * P)
    h = patches @ params["w_patch"] + params["pe_row"][None, None, :]
    for p in params["layers"]:
        hn = _ref_layernorm(h, p["ln1_g"], p["ln1_b"])
        qkv = (hn @ p["w_qkv"]).reshape(B, S, 3, nH, Dh).transpose(2, 0, 3, 1, 4)
        q, k, v = qkv[0], qkv[1], qkv[2]
        s = jnp.einsum("bhqd,bhkd->bhqk", q, k) * (Dh ** -0.5)
        a = jax.nn.softmax(s, axis=-1)
        o = jnp.einsum("bhqk,bhkd->bhqd", a, v).transpose(0, 2, 1, 3).reshape(B, S, E)
        h = h + o @ p["w_out"]
        hn = _ref_layernorm(h, p["ln2_g"], p["ln2_b"])
        h = h + jnp.maximum(hn @ p["w_ff1"], 0.0) @ p["w_ff2"]
    h = _ref_layernorm(h, params["final_g"], params["final_b"])
    y = (h @ params["w_unpatch"]).reshape(B, Hp, Wp, Co, P, P)
    return y.transpose(0, 3, 1, 4, 2, 5).reshape(B, Co, H, W)


# --------------------------------------------------------------------------- main
if __name__ == "__main__":
    cfg = dict(in_channels=2, out_channels=2, patch_size=4,
               embed_dim=128, num_heads=4, num_layers=2)
    B, H, W = 2, 16, 16

    key = jax.random.PRNGKey(0)
    kx, kp = jax.random.split(key)
    x = jax.random.normal(kx, (B, cfg["in_channels"], H, W), dtype=jnp.float32)
    params = init_params(kp, cfg)

    out = transformer_forward(x, params, cfg)
    out = jax.block_until_ready(out)
    assert out.shape == (B, cfg["out_channels"], H, W)

    ref = reference_forward(x, params, cfg)
    err = float(jnp.max(jnp.abs(out - ref)))
    assert jnp.allclose(out, ref, atol=2e-3, rtol=2e-3), f"mismatch vs reference: {err}"

    print("KERNEL_OK")
</pallas_src>

<mosaic_0001>
module attributes {stable_mosaic.version = 11 : i64} {
  func.func @_matmul_kernel(%arg0: i32, %arg1: i32, %arg2: i32, %arg3: memref<32x32xf32, #tpu.memory_space<vmem>>, %arg4: memref<32x128xf32, #tpu.memory_space<vmem>>, %arg5: memref<1x128xf32, #tpu.memory_space<vmem>>, %arg6: memref<32x128xf32, #tpu.memory_space<vmem>>, %arg7: memref<32x128xf32, #tpu.memory_space<vmem>>) attributes {dimension_semantics = [#tpu.dimension_semantics<parallel>, #tpu.dimension_semantics<parallel>, #tpu.dimension_semantics<arbitrary>], iteration_bounds = array<i64: 1, 1, 1>, scalar_prefetch = 0 : i64, scratch_operands = 1 : i64, tpu.core_type = #tpu.core_type<tc>, window_params = [{transform_indices = @transform_0, window_bounds = array<i64: 32, 32>}, {transform_indices = @transform_1, window_bounds = array<i64: 32, 128>}, {transform_indices = @transform_2, window_bounds = array<i64: 1, 128>}, {transform_indices = @transform_3, window_bounds = array<i64: 32, 128>}]} {
    %c0_i32 = arith.constant 0 : i32
    %0 = arith.cmpi eq, %arg2, %c0_i32 : i32
    %1 = arith.extui %0 : i1 to i32
    %c0_i32_0 = arith.constant 0 : i32
    %2 = arith.cmpi ne, %1, %c0_i32_0 : i32
    scf.if %2 {
      %cst_10 = arith.constant 0.000000e+00 : f32
      %12 = vector.broadcast %cst_10 : f32 to vector<32x128xf32>
      %c0_11 = arith.constant 0 : index
      %c0_12 = arith.constant 0 : index
      %13 = vector.load %arg7[%c0_11, %c0_12] : memref<32x128xf32, #tpu.memory_space<vmem>>, vector<32x128xf32>
      tpu.vector_store %arg7[%c0_11, %c0_12], %12 {strides = array<i32>} : memref<32x128xf32, #tpu.memory_space<vmem>>, vector<32x128xf32>,
    } else {
    }
    %c0 = arith.constant 0 : index
    %c0_1 = arith.constant 0 : index
    %3 = vector.load %arg7[%c0, %c0_1] : memref<32x128xf32, #tpu.memory_space<vmem>>, vector<32x128xf32>
    %c0_2 = arith.constant 0 : index
    %c0_3 = arith.constant 0 : index
    %4 = vector.load %arg3[%c0_2, %c0_3] : memref<32x32xf32, #tpu.memory_space<vmem>>, vector<32x32xf32>
    %c0_4 = arith.constant 0 : index
    %c0_5 = arith.constant 0 : index
    %5 = vector.load %arg4[%c0_4, %c0_5] : memref<32x128xf32, #tpu.memory_space<vmem>>, vector<32x128xf32>
    %cst = arith.constant dense<0.000000e+00> : vector<32x128xf32>
    %6 = tpu.matmul %4, %5, %cst {dimension_numbers = #tpu.dot_dimension_numbers<[1], [0], [0], [1], [0, 0, 1, 1], [], []>} : vector<32x32xf32>, vector<32x128xf32>, vector<32x128xf32> -> vector<32x128xf32>
    %7 = arith.addf %3, %6 : vector<32x128xf32>
    %c0_6 = arith.constant 0 : index
    %c0_7 = arith.constant 0 : index
    %8 = vector.load %arg7[%c0_6, %c0_7] : memref<32x128xf32, #tpu.memory_space<vmem>>, vector<32x128xf32>
    tpu.vector_store %arg7[%c0_6, %c0_7], %7 {strides = array<i32>} : memref<32x128xf32, #tpu.memory_space<vmem>>, vector<32x128xf32>,
    %c0_i32_8 = arith.constant 0 : i32
    %9 = arith.cmpi eq, %arg2, %c0_i32_8 : i32
    %10 = arith.extui %9 : i1 to i32
    %c0_i32_9 = arith.constant 0 : i32
    %11 = arith.cmpi ne, %10, %c0_i32_9 : i32
    scf.if %11 {
      %c0_10 = arith.constant 0 : index
      %c0_11 = arith.constant 0 : index
      %12 = vector.load %arg7[%c0_10, %c0_11] : memref<32x128xf32, #tpu.memory_space<vmem>>, vector<32x128xf32>
      %c0_12 = arith.constant 0 : index
      %c0_13 = arith.constant 0 : index
      %13 = vector.load %arg5[%c0_12, %c0_13] : memref<1x128xf32, #tpu.memory_space<vmem>>, vector<1x128xf32>
      %14 = vector.broadcast %13 : vector<1x128xf32> to vector<32x128xf32>
      %15 = arith.addf %12, %14 : vector<32x128xf32>
      %c0_14 = arith.constant 0 : index
      %c0_15 = arith.constant 0 : index
      %16 = vector.load %arg6[%c0_14, %c0_15] : memref<32x128xf32, #tpu.memory_space<vmem>>, vector<32x128xf32>
      tpu.vector_store %arg6[%c0_14, %c0_15], %15 {strides = array<i32>} : memref<32x128xf32, #tpu.memory_space<vmem>>, vector<32x128xf32>,
    } else {
    }
    return
  }
  func.func @transform_0(%arg0: i32, %arg1: i32, %arg2: i32) -> (i32, i32) {
    %c0_i32 = arith.constant 0 : i32
    return %arg0, %arg2 : i32, i32
  }
  func.func @transform_1(%arg0: i32, %arg1: i32, %arg2: i32) -> (i32, i32) {
    %c0_i32 = arith.constant 0 : i32
    return %arg2, %arg1 : i32, i32
  }
  func.func @transform_2(%arg0: i32, %arg1: i32, %arg2: i32) -> (i32, i32) {
    %c0_i32 = arith.constant 0 : i32
    %c0_i32_0 = arith.constant 0 : i32
    return %c0_i32, %arg1 : i32, i32
  }
  func.func @transform_3(%arg0: i32, %arg1: i32, %arg2: i32) -> (i32, i32) {
    %c0_i32 = arith.constant 0 : i32
    return %arg0, %arg1 : i32, i32
  }
}

</mosaic_0001>

<llo_original>
// kernel: tpu_custom_call.1
$region0: #{tpu_custom_call.1}
  #allocation0 [shape = 'u32[]', space=smem, size = 0x4, offset = 0x4, fixed_abs, tag = 'smem constant byte address 0x4 - core index']
  #allocation1 [shape = 'u32[144,128]{1,0:T(1,128)}', space=vmem, size = 0x12000, scoped, tag = 'internal scratch']
  #allocation2 [shape = 'f32[32,128]{1,0:T(8,128)}', space=vmem, size = 0x4000, scoped, tag = 'scratch operand']
  %s0 = inlined_call_operand.hbm [shape: f32[32,32], index: 0, kind: input, shape index: {}]
  %s1 = inlined_call_operand.hbm [shape: f32[32,128], index: 1, kind: input, shape index: {}]
  %s2 = inlined_call_operand.vmem [shape: f32[1,128], index: 2, kind: input, shape index: {}]
  %s3 = inlined_call_operand.hbm [shape: f32[32,128], index: 3, kind: output, shape index: {}]
  %s4 = sld [smem:[#allocation0]]
  $region38: #{tpu_custom_call.1} parent=0
    _
  %s6 = ssub.s32 1, %s4
  %s7 = scalar_select 0, %s6, %s4
  $region1: #{tpu_custom_call.1} parent=0
    #allocation3 [shape = 'u8[16384]{0}', space=vmem, size = 0x4000, scoped, tag = 'input window, operand 0, single buffered']
    #allocation4 [shape = 's32[1]{0}', space=sflag, size = 0x4, scoped, tag = 'scoped memory for tpu_custom_call.1']
    #allocation5 [shape = 's32[1]{0}', space=sflag, size = 0x4, scoped, tag = 'scoped memory for tpu_custom_call.1']
    #allocation6 [shape = 'u8[16384]{0}', space=vmem, size = 0x4000, scoped, tag = 'input window, operand 1, single buffered']
    #allocation7 [shape = 's32[1]{0}', space=sflag, size = 0x4, scoped, tag = 'scoped memory for tpu_custom_call.1']
    #allocation8 [shape = 'u8[16384]{0}', space=vmem, size = 0x4000, scoped, tag = 'output window, operand 0, single buffered']
    %8 = vsyncpa [#allocation4], 0
    %9 = vsyncpa [#allocation7], 0
    %10 = vsyncpa [#allocation5], 0
    // Predicated region
    $region2: #{tpu_custom_call.1} parent=1 // pred_check
      _
    $region3: #{tpu_custom_call.1} parent=1 // pred_check_branch
      %12 = sbr.rel (0) target = $region5
    $region4: #{tpu_custom_call.1} parent=1 // pred_region
      %s14 = ssub.s32 512, 512
      %15 = vsyncadd [#allocation4], %s14
      %s16 = sshll.u32 [#allocation3], 4
      %s17 = int_to_ptr.vmem [resolvable:$true] %s16
      %22 = dma.hbm_to_vmem [thread:$0]  %s0, 512, %s17, [#allocation4], 128, 128, 8
    $region5: #{tpu_custom_call.1} parent=1 // pred_fallthru
      _
    // Predicated region
    $region6: #{tpu_custom_call.1} parent=1 // pred_check
      _
    $region7: #{tpu_custom_call.1} parent=1 // pred_check_branch
      %24 = sbr.rel (0) target = $region9
    $region8: #{tpu_custom_call.1} parent=1 // pred_region
      %s26 = ssub.s32 512, 512
      %27 = vsyncadd [#allocation7], %s26
      %s28 = sshll.u32 [#allocation6], 4
      %s29 = int_to_ptr.vmem [resolvable:$true] %s28
      %34 = dma.hbm_to_vmem [thread:$0]  %s1, 512, %s29, [#allocation7], 128, 128, 8
    $region9: #{tpu_custom_call.1} parent=1 // pred_fallthru
      _
    // Predicated region
    $region10: #{tpu_custom_call.1} parent=1 // pred_check
      _
    $region11: #{tpu_custom_call.1} parent=1 // pred_check_branch
      %36 = sbr.rel (0) target = $region13
    $region12: #{tpu_custom_call.1} parent=1 // pred_region
      _
    $region13: #{tpu_custom_call.1} parent=1 // pred_fallthru
      _
    // Predicated region
    $region14: #{tpu_custom_call.1} parent=1 // pred_check
      _
    $region15: #{tpu_custom_call.1} parent=1 // pred_check_branch
      %38 = sbr.rel (0) target = $region17
    $region16: #{tpu_custom_call.1} parent=1 // pred_region
      %39 = dma.done [#allocation4], 512
    $region17: #{tpu_custom_call.1} parent=1 // pred_fallthru
      _
    // Predicated region
    $region18: #{tpu_custom_call.1} parent=1 // pred_check
      _
    $region19: #{tpu_custom_call.1} parent=1 // pred_check_branch
      %41 = sbr.rel (0) target = $region21
    $region20: #{tpu_custom_call.1} parent=1 // pred_region
      %42 = dma.done [#allocation7], 512
    $region21: #{tpu_custom_call.1} parent=1 // pred_fallthru
      _
    %p43 = scmp.eq.s32.totalorder 0, 0
    // Predicated region
    $region22: #{tpu_custom_call.1} parent=1 // pred_check
      %p44 = pneg %p43
    $region23: #{tpu_custom_call.1} parent=1 // pred_check_branch
      %46 = sbr.rel (%p44) target = $region25
    $region24: #{tpu_custom_call.1} parent=1 // pred_region
      %47 = vst [vmem:[#allocation2] sm:$0xff] 0.0
      %48 = vst [vmem:[#allocation2 + $0x8] sm:$0xff] 0.0
      %49 = vst [vmem:[#allocation2 + $0x10] sm:$0xff] 0.0
      %50 = vst [vmem:[#allocation2 + $0x18] sm:$0xff] 0.0
    $region25: #{tpu_custom_call.1} parent=1 // pred_fallthru
      _
    %v51 = vld [vmem:[#allocation2] sm:$0xff]
    %v52 = vld [vmem:[#allocation2 + $0x8] sm:$0xff]
    %v53 = vld [vmem:[#allocation2 + $0x10] sm:$0xff]
    %v54 = vld [vmem:[#allocation2 + $0x18] sm:$0xff]
    %v55 = vld [vmem:[#allocation3] sm:$0xff]
    %v56 = vld [vmem:[#allocation3 + $0x8] sm:$0xff]
    %v57 = vld [vmem:[#allocation3 + $0x10] sm:$0xff]
    %v58 = vld [vmem:[#allocation3 + $0x18] sm:$0xff]
    %v59 = vld [vmem:[#allocation6] sm:$0xff]
    %v60 = vld [vmem:[#allocation6 + $0x8] sm:$0xff]
    %v61 = vld [vmem:[#allocation6 + $0x10] sm:$0xff]
    %v62 = vld [vmem:[#allocation6 + $0x18] sm:$0xff]
    %vm63 = vcmask 261120
    %v65 = vsel %vm63, %v55, 0
    %v68 = vsel %vm63, %v56, 0
    %v71 = vsel %vm63, %v57, 0
    %v74 = vsel %vm63, %v58, 0
    %76 = vmatprep.subr.mxu0 0.0
    %77 = vmatpush1.msra.mxu0 %v59
    %78 = vmatprep.subr.mxu0 0.0
    %79 = vmatpush1.msra.mxu0 %v60
    %80 = vmatprep.subr.mxu0 0.0
    %81 = vmatpush1.msra.mxu0 %v61
    %82 = vmatprep.subr.mxu0 0.0
    %83 = vmatpush1.msra.mxu0 %v62
    %84 = vmatprep.subr.mxu0 0.0
    %85 = vmatpush1.msra.mxu0 0.0
    %86 = vmatprep.subr.mxu0 0.0
    %87 = vmatpush1.msra.mxu0 0.0
    %88 = vmatprep.subr.mxu0 0.0
    %89 = vmatpush1.msra.mxu0 0.0
    %90 = vmatprep.subr.mxu0 0.0
    %91 = vmatpush1.msra.mxu0 0.0
    %92 = vmatprep.subr.mxu0 0.0
    %93 = vmatpush1.msra.mxu0 0.0
    %94 = vmatprep.subr.mxu0 0.0
    %95 = vmatpush1.msra.mxu0 0.0
    %96 = vmatprep.subr.mxu0 0.0
    %97 = vmatpush1.msra.mxu0 0.0
    %98 = vmatprep.subr.mxu0 0.0
    %99 = vmatpush1.msra.mxu0 0.0
    %100 = vmatprep.subr.mxu0 0.0
    %101 = vmatpush1.msra.mxu0 0.0
    %102 = vmatprep.subr.mxu0 0.0
    %103 = vmatpush1.msra.mxu0 0.0
    %104 = vmatprep.subr.mxu0 0.0
    %105 = vmatpush1.msra.mxu0 0.0
    %106 = vmatprep.subr.mxu0 0.0
    %107 = vmatpush1.msra.mxu0 0.0
    %108 = vmatprep.subr.mxu0 0.0
    %109 = vmatpush1.msra.mxu0 0.0
    %110 = vmatprep.subr.mxu0 0.0
    %111 = vmatpush1.msra.mxu0 0.0
    %112 = vmatprep.subr.mxu0 0.0
    %113 = vmatpush1.msra.mxu0 0.0
    %114 = vmatprep.subr.mxu0 0.0
    %115 = vmatpush1.msra.mxu0 0.0
    %116 = vmatprep.subr.mxu0 0.0
    %117 = vmatpush1.msra.mxu0 0.0
    %118 = vmatprep.subr.mxu0 0.0
    %119 = vmatpush1.msra.mxu0 0.0
    %120 = vmatprep.subr.mxu0 0.0
    %121 = vmatpush1.msra.mxu0 0.0
    %122 = vmatprep.subr.mxu0 0.0
    %123 = vmatpush1.msra.mxu0 0.0
    %124 = vmatprep.subr.mxu0 0.0
    %125 = vmatpush1.msra.mxu0 0.0
    %126 = vmatprep.subr.mxu0 0.0
    %127 = vmatpush1.msra.mxu0 0.0
    %128 = vmatprep.subr.mxu0 0.0
    %129 = vmatpush1.msra.mxu0 0.0
    %130 = vmatprep.subr.mxu0 0.0
    %131 = vmatpush1.msra.mxu0 0.0
    %132 = vmatprep.subr.mxu0 0.0
    %133 = vmatpush1.msra.mxu0 0.0
    %134 = vmatprep.subr.mxu0 0.0
    %135 = vmatpush1.msra.mxu0 0.0
    %136 = vmatprep.subr.mxu0 0.0
    %137 = vmatpush1.msra.mxu0 0.0
    %138 = vmatprep.subr.mxu0 0.0
    %139 = vmatpush1.msra.mxu0 0.0
    %140 = vmatprep.mubr.f32.mxu0 0.0
    %141 = vmatmul.mubr.f32.gmra.mrb[0].mxu0 %v65
    %v142 = vpop.f32.mrb[0].mxu0
    %v143 = vadd.f32 0.0, %v142
    %v144 = vpop.f32.mrb[0].mxu0
    %145 = vmatprep.mubr.f32.mxu0 0.0
    %146 = vmatmul.mubr.f32.gmra.mrb[0].mxu0 %v68
    %v147 = vpop.f32.mrb[0].mxu0
    %v148 = vadd.f32 0.0, %v147
    %v149 = vpop.f32.mrb[0].mxu0
    %150 = vmatprep.mubr.f32.mxu0 0.0
    %151 = vmatmul.mubr.f32.gmra.mrb[0].mxu0 %v71
    %v152 = vpop.f32.mrb[0].mxu0
    %v153 = vadd.f32 0.0, %v152
    %v154 = vpop.f32.mrb[0].mxu0
    %155 = vmatprep.mubr.f32.mxu0 0.0
    %156 = vmatmul.mubr.f32.gmra.mrb[0].mxu0 %v74
    %v157 = vpop.f32.mrb[0].mxu0
    %v158 = vadd.f32 0.0, %v157
    %v159 = vpop.f32.mrb[0].mxu0
    %160 = vdwg.mxu0
    %v161 = vadd.f32 %v51, %v143
    %v162 = vadd.f32 %v52, %v148
    %v163 = vadd.f32 %v53, %v153
    %v164 = vadd.f32 %v54, %v158
    %165 = vst [vmem:[#allocation2] sm:$0xff] %v161
    %166 = vst [vmem:[#allocation2 + $0x8] sm:$0xff] %v162
    %167 = vst [vmem:[#allocation2 + $0x10] sm:$0xff] %v163
    %168 = vst [vmem:[#allocation2 + $0x18] sm:$0xff] %v164
    // Predicated region
    $region26: #{tpu_custom_call.1} parent=1 // pred_check
      %p169 = pneg %p43
    $region27: #{tpu_custom_call.1} parent=1 // pred_check_branch
      %171 = sbr.rel (%p169) target = $region29
    $region28: #{tpu_custom_call.1} parent=1 // pred_region
      %v172 = vld [vmem:[#allocation2] sm:$0xff]
      %v173 = vld [vmem:[#allocation2 + $0x8] sm:$0xff]
      %v174 = vld [vmem:[#allocation2 + $0x10] sm:$0xff]
      %v175 = vld [vmem:[#allocation2 + $0x18] sm:$0xff]
      %v176 = vld [vmem:[%s2] sm:$0x1]
      %v178 = vlaneseq
      %v179 = vshrl.u32 %v178, 7
      %v180 = vsub.s32 0, %v179
      %v181 = vrot.slane %v176, %v180
      %v183 = vadd.f32 %v172, %v181
      %v184 = vadd.f32 %v173, %v181
      %v185 = vadd.f32 %v174, %v181
      %v186 = vadd.f32 %v175, %v181
      %187 = vst [vmem:[#allocation8] sm:$0xff] %v183
      %188 = vst [vmem:[#allocation8 + $0x8] sm:$0xff] %v184
      %189 = vst [vmem:[#allocation8 + $0x10] sm:$0xff] %v185
      %190 = vst [vmem:[#allocation8 + $0x18] sm:$0xff] %v186
    $region29: #{tpu_custom_call.1} parent=1 // pred_fallthru
      _
    // Predicated region
    $region30: #{tpu_custom_call.1} parent=1 // pred_check
      _
    $region31: #{tpu_custom_call.1} parent=1 // pred_check_branch
      %192 = sbr.rel (0) target = $region33
    $region32: #{tpu_custom_call.1} parent=1 // pred_region
      %s194 = ssub.s32 512, 512
      %195 = vsyncadd [#allocation5], %s194
      %s196 = sshll.u32 [#allocation8], 4
      %s197 = int_to_ptr.vmem [resolvable:$true] %s196
      %202 = dma.vmem_to_hbm [thread:$0]  %s197, 512, %s3, [#allocation5], 128, 128, 8
    $region33: #{tpu_custom_call.1} parent=1 // pred_fallthru
      _
    // Predicated region
    $region34: #{tpu_custom_call.1} parent=1 // pred_check
      _
    $region35: #{tpu_custom_call.1} parent=1 // pred_check_branch
      %204 = sbr.rel (0) target = $region37
    $region36: #{tpu_custom_call.1} parent=1 // pred_region
      %205 = dma.done [#allocation5], 512
    $region37: #{tpu_custom_call.1} parent=1 // pred_fallthru
      _
    %206 = vsyncpa [#allocation4], 1
    %207 = vsyncpa [#allocation7], 1
    %208 = vsyncpa [#allocation5], 1

</llo_original>
